<compile_context>
chip_gen: v7x
topology: tpu7x:2x2x1
jax: 0.10.0
libtpu: 0.0.40
codegen_flags: <defaults>
</compile_context>

<pallas_src>
import functools

import jax
import jax.numpy as jnp
from jax.experimental import pallas as pl
from jax.experimental.pallas import tpu as pltpu


EPS = 1e-6


def _gem_kernel(p_ref, x_ref, o_ref, acc_ref, *, hw: int, compute_dtype):
    # p_ref:   SMEM (1,) f32 learnable exponent
    # x_ref:   VMEM (TM, TK) tile of the flattened input (TK == HW unless the
    #          spatial extent is huge and gets chunked)
    # o_ref:   VMEM (TM, 1) per-row GeM result (written on the last HW chunk)
    # acc_ref: VMEM (TM, 1) f32 running sum of x**p over the spatial axis
    k = pl.program_id(1)

    @pl.when(k == 0)
    def _init():
        acc_ref[...] = jnp.zeros_like(acc_ref)

    p = p_ref[0]

    x = x_ref[...]
    if x.dtype != compute_dtype:
        x = x.astype(compute_dtype)
    x = jnp.maximum(x, jnp.asarray(EPS, compute_dtype))        # clamp(min=eps)
    xp = jnp.exp(p.astype(compute_dtype) * jnp.log(x))         # x ** p

    tk = xp.shape[-1]
    if hw % tk != 0:
        # Ragged last HW chunk: zero out the (unspecified) padded lanes before
        # they reach the reduction.  Static check, so the common full-extent
        # path pays nothing.
        base = k * tk
        lane = jax.lax.broadcasted_iota(jnp.int32, xp.shape, dimension=1) + base
        xp = jnp.where(lane < hw, xp, jnp.zeros_like(xp))

    acc_ref[...] += jnp.sum(xp.astype(jnp.float32), axis=-1, keepdims=True)

    @pl.when(k == pl.num_programs(1) - 1)
    def _finalize():
        inv_p = 1.0 / p                                  # one scalar divide
        m = acc_ref[...] * (1.0 / hw)                    # avg over full H*W
        o_ref[...] = jnp.exp(jnp.log(m) * inv_p).astype(o_ref.dtype)  # **(1/p)


def _vmem_capacity_bytes() -> int:
    """Per-generation VMEM capacity; conservative fallback is v7x (64 MiB)."""
    try:
        cap = int(pltpu.get_tpu_info().vmem_capacity_bytes)
        if cap > 0:
            return cap
    except Exception:
        pass
    return 64 * 1024 * 1024


def _sublane_multiple(itemsize: int) -> int:
    # Minimum packed sublane tile: f32 -> 8, bf16 -> 16, int8/fp8 -> 32.
    return {4: 8, 2: 16, 1: 32}.get(itemsize, 8)


def _choose_tiling(nc: int, hw: int, itemsize: int, per_tile_budget: int):
    """Pick (TM, TK).  TK == hw (full extent) unless a minimal row tile would
    not fit the per-tile VMEM budget, in which case HW is chunked."""
    sub = _sublane_multiple(itemsize)
    row_bytes = hw * itemsize

    if min(nc, sub) * row_bytes <= per_tile_budget:
        # Common case: full spatial extent per tile.
        tk = hw
        tm = per_tile_budget // row_bytes
        if tm >= nc:
            tm = nc                                    # full extent -> exempt
        else:
            tm = max(sub, (tm // sub) * sub)
        # v7x megacore: prefer >= 4 row steps for load balance across the two
        # TensorCores, but never shrink tiles below multi-MiB to get there.
        steps = -(-nc // tm)
        if steps < 4:
            tm_alt = -(-nc // 4)
            tm_alt = max(sub, ((tm_alt + sub - 1) // sub) * sub)
            if tm_alt < tm and tm_alt * row_bytes >= (4 << 20):
                tm = tm_alt
    else:
        # Huge spatial extent: chunk HW along a second ("arbitrary") grid axis.
        tm = nc if nc < sub else sub
        tk = (per_tile_budget // (tm * itemsize)) // 128 * 128
        tk = max(128, tk)
        if tk >= hw:
            tk = hw
    return tm, tk


def gem_pallas(x: jax.Array, p: jax.Array) -> jax.Array:
    """GeM pooling. x: (N, C, H, W); p: (1,) learnable exponent."""
    N, C, H, W = x.shape
    NC, HW = N * C, H * W
    x2d = x.reshape(NC, HW)                 # free view (row-major contiguous)
    p = jnp.asarray(p, dtype=jnp.float32).reshape((1,))

    itemsize = x2d.dtype.itemsize
    vmem_cap = _vmem_capacity_bytes()
    per_tile_budget = max(4 << 20, int(vmem_cap * 0.20))

    tm, tk = _choose_tiling(NC, HW, itemsize, per_tile_budget)
    grid = (pl.cdiv(NC, tm), pl.cdiv(HW, tk))

    # bf16 inputs: transcendental chain stays in bf16 (2x EUP throughput on
    # v6e/v7x); accumulation is always f32.  f32 / other dtypes compute in f32.
    compute_dtype = jnp.bfloat16 if x2d.dtype == jnp.bfloat16 else jnp.float32

    in_tile_bytes = tm * tk * itemsize
    vmem_limit = 2 * in_tile_bytes + 2 * tm * itemsize + tm * 4 + (4 << 20)
    vmem_limit = max(16 << 20, min(vmem_limit, int(vmem_cap * 0.9)))

    kernel = functools.partial(_gem_kernel, hw=HW, compute_dtype=compute_dtype)

    cost = pl.CostEstimate(
        flops=3 * NC * HW,
        transcendentals=2 * NC * HW,
        bytes_accessed=NC * HW * itemsize + NC * itemsize + 4,
    )

    out2d = pl.pallas_call(
        kernel,
        out_shape=jax.ShapeDtypeStruct((NC, 1), x.dtype),
        grid_spec=pltpu.PrefetchScalarGridSpec(
            num_scalar_prefetch=0,
            grid=grid,
            in_specs=[
                pl.BlockSpec(memory_space=pltpu.MemorySpace.SMEM),    # p scalar
                pl.BlockSpec((tm, tk), lambda i, k: (i, k)),          # x tile
            ],
            out_specs=pl.BlockSpec((tm, 1), lambda i, k: (i, 0)),
            scratch_shapes=[pltpu.VMEM((tm, 1), jnp.float32)],        # acc
        ),
        compiler_params=pltpu.CompilerParams(
            dimension_semantics=("parallel", "arbitrary"),
            vmem_limit_bytes=vmem_limit,
        ),
        cost_estimate=cost,
    )(p, x2d)

    return out2d.reshape(N, C, 1, 1)


def gem_reference(x: jax.Array, p: jax.Array) -> jax.Array:
    """Pure-JAX reference mirroring the PyTorch forward."""
    xc = jnp.maximum(x, EPS)
    pooled = jnp.mean(xc ** p[0], axis=(-2, -1), keepdims=True)
    return pooled ** (1.0 / p[0])


if __name__ == "__main__":
    key = jax.random.PRNGKey(0)
    N, C, H, W = 2, 4, 16, 16
    x = jax.random.normal(key, (N, C, H, W), dtype=jnp.float32)

    # Deterministic parameter init, matching nn.Parameter(torch.ones(1) * 3.0)
    p = jnp.ones((1,), dtype=jnp.float32) * 3.0

    out = jax.block_until_ready(gem_pallas(x, p))
    ref = gem_reference(x, p)

    assert out.shape == (N, C, 1, 1), out.shape
    assert jnp.allclose(out, ref, rtol=1e-5, atol=1e-5), (out, ref)

    print("KERNEL_OK")
</pallas_src>

<mosaic_0001>
module attributes {stable_mosaic.version = 11 : i64} {
  func.func @_gem_kernel(%arg0: i32, %arg1: i32, %arg2: memref<1xf32, #tpu.memory_space<smem>>, %arg3: memref<8x256xf32, #tpu.memory_space<vmem>>, %arg4: memref<8x1xf32, #tpu.memory_space<vmem>>, %arg5: memref<8x1xf32, #tpu.memory_space<vmem>>) attributes {dimension_semantics = [#tpu.dimension_semantics<parallel>, #tpu.dimension_semantics<arbitrary>], iteration_bounds = array<i64: 1, 1>, scalar_prefetch = 0 : i64, scratch_operands = 1 : i64, tpu.core_type = #tpu.core_type<tc>, window_params = [{transform_indices = @transform_0, window_bounds = array<i64: 1>}, {transform_indices = @transform_1, window_bounds = array<i64: 8, 256>}, {transform_indices = @transform_2, window_bounds = array<i64: 8, 1>}]} {
    %c0_i32 = arith.constant 0 : i32
    %0 = arith.cmpi eq, %arg1, %c0_i32 : i32
    %1 = arith.extui %0 : i1 to i32
    %c0_i32_0 = arith.constant 0 : i32
    %2 = arith.cmpi ne, %1, %c0_i32_0 : i32
    scf.if %2 {
      %cst_10 = arith.constant 0.000000e+00 : f32
      %19 = vector.broadcast %cst_10 : f32 to vector<8x1xf32>
      %c0_11 = arith.constant 0 : index
      %c0_12 = arith.constant 0 : index
      %20 = vector.load %arg5[%c0_11, %c0_12] : memref<8x1xf32, #tpu.memory_space<vmem>>, vector<8x1xf32>
      tpu.vector_store %arg5[%c0_11, %c0_12], %19 {strides = array<i32>} : memref<8x1xf32, #tpu.memory_space<vmem>>, vector<8x1xf32>,
    } else {
    }
    %c0 = arith.constant 0 : index
    %3 = memref.load %arg2[%c0] : memref<1xf32, #tpu.memory_space<smem>>
    %c0_1 = arith.constant 0 : index
    %c0_2 = arith.constant 0 : index
    %4 = vector.load %arg3[%c0_1, %c0_2] : memref<8x256xf32, #tpu.memory_space<vmem>>, vector<8x256xf32>
    %cst = arith.constant 9.99999997E-7 : f32
    %5 = vector.broadcast %cst : f32 to vector<8x256xf32>
    %6 = arith.maximumf %4, %5 : vector<8x256xf32>
    %7 = math.log %6 : vector<8x256xf32>
    %8 = vector.broadcast %3 : f32 to vector<8x256xf32>
    %9 = arith.mulf %8, %7 : vector<8x256xf32>
    %10 = math.exp %9 : vector<8x256xf32>
    %c0_3 = arith.constant 0 : index
    %c0_4 = arith.constant 0 : index
    %11 = vector.load %arg5[%c0_3, %c0_4] : memref<8x1xf32, #tpu.memory_space<vmem>>, vector<8x1xf32>
    %cst_5 = arith.constant dense<0.000000e+00> : vector<8xf32>
    %12 = vector.multi_reduction <add>, %10, %cst_5 [1] : vector<8x256xf32> to vector<8xf32>
    %13 = vector.shape_cast %12 : vector<8xf32> to vector<8x1xf32>
    %14 = arith.addf %11, %13 : vector<8x1xf32>
    %c0_6 = arith.constant 0 : index
    %c0_7 = arith.constant 0 : index
    %15 = vector.load %arg5[%c0_6, %c0_7] : memref<8x1xf32, #tpu.memory_space<vmem>>, vector<8x1xf32>
    tpu.vector_store %arg5[%c0_6, %c0_7], %14 {strides = array<i32>} : memref<8x1xf32, #tpu.memory_space<vmem>>, vector<8x1xf32>,
    %c0_i32_8 = arith.constant 0 : i32
    %16 = arith.cmpi eq, %arg1, %c0_i32_8 : i32
    %17 = arith.extui %16 : i1 to i32
    %c0_i32_9 = arith.constant 0 : i32
    %18 = arith.cmpi ne, %17, %c0_i32_9 : i32
    scf.if %18 {
      %cst_10 = arith.constant 1.000000e+00 : f32
      %19 = arith.divf %cst_10, %3 : f32
      %c0_11 = arith.constant 0 : index
      %c0_12 = arith.constant 0 : index
      %20 = vector.load %arg5[%c0_11, %c0_12] : memref<8x1xf32, #tpu.memory_space<vmem>>, vector<8x1xf32>
      %cst_13 = arith.constant 3.906250e-03 : f32
      %21 = vector.broadcast %cst_13 : f32 to vector<8x1xf32>
      %22 = arith.mulf %20, %21 : vector<8x1xf32>
      %23 = math.log %22 : vector<8x1xf32>
      %24 = vector.broadcast %19 : f32 to vector<8x1xf32>
      %25 = arith.mulf %23, %24 : vector<8x1xf32>
      %26 = math.exp %25 : vector<8x1xf32>
      %c0_14 = arith.constant 0 : index
      %c0_15 = arith.constant 0 : index
      %27 = vector.load %arg4[%c0_14, %c0_15] : memref<8x1xf32, #tpu.memory_space<vmem>>, vector<8x1xf32>
      tpu.vector_store %arg4[%c0_14, %c0_15], %26 {strides = array<i32>} : memref<8x1xf32, #tpu.memory_space<vmem>>, vector<8x1xf32>,
    } else {
    }
    return
  }
  func.func @transform_0(%arg0: i32, %arg1: i32) -> i32 {
    %c0_i32 = arith.constant 0 : i32
    %c0_i32_0 = arith.constant 0 : i32
    return %c0_i32 : i32
  }
  func.func @transform_1(%arg0: i32, %arg1: i32) -> (i32, i32) {
    %c0_i32 = arith.constant 0 : i32
    return %arg0, %arg1 : i32, i32
  }
  func.func @transform_2(%arg0: i32, %arg1: i32) -> (i32, i32) {
    %c0_i32 = arith.constant 0 : i32
    %c0_i32_0 = arith.constant 0 : i32
    return %arg0, %c0_i32 : i32, i32
  }
}

</mosaic_0001>

<llo_original>
// kernel: tpu_custom_call.1
$region0: #{tpu_custom_call.1}
  #allocation0 [shape = 'u32[]', space=smem, size = 0x4, offset = 0x4, fixed_abs, tag = 'smem constant byte address 0x4 - core index']
  #allocation1 [shape = 'u32[144,128]{1,0:T(1,128)}', space=vmem, size = 0x12000, scoped, tag = 'internal scratch']
  #allocation2 [shape = 'f32[8,1]{1,0:T(8,128)}', space=vmem, size = 0x1000, scoped, tag = 'scratch operand']
  #allocation3 [shape = 'f32[1]{0:T(128)S(6)}', space=smem, size = 0x200, scoped, tag = 'scoped memory for tpu_custom_call.1']
  %s0 = inlined_call_operand.<no memory space> [shape: f32[1], index: 0, kind: input, shape index: {}]
  %s1 = inlined_call_operand.hbm [shape: f32[8,256], index: 1, kind: input, shape index: {}]
  %s2 = inlined_call_operand.vmem [shape: f32[8,1], index: 2, kind: output, shape index: {}]
  %s3 = sld [smem:[#allocation0]]
  $region30: #{tpu_custom_call.1} parent=0
    _
  %s5 = ssub.s32 1, %s3
  %s6 = scalar_select 0, %s5, %s3
  %7 = sst [smem:[#allocation3]] %s0
  $region1: #{tpu_custom_call.1} parent=0
    #allocation4 [shape = 'u8[8192]{0}', space=vmem, size = 0x2000, scoped, tag = 'input window, operand 1, single buffered']
    #allocation5 [shape = 's32[1]{0}', space=sflag, size = 0x4, scoped, tag = 'scoped memory for tpu_custom_call.1']
    %8 = vsyncpa [#allocation5], 0
    // Predicated region
    $region2: #{tpu_custom_call.1} parent=1 // pred_check
      _
    $region3: #{tpu_custom_call.1} parent=1 // pred_check_branch
      %10 = sbr.rel (0) target = $region5
    $region4: #{tpu_custom_call.1} parent=1 // pred_region
      _
    $region5: #{tpu_custom_call.1} parent=1 // pred_fallthru
      _
    // Predicated region
    $region6: #{tpu_custom_call.1} parent=1 // pred_check
      _
    $region7: #{tpu_custom_call.1} parent=1 // pred_check_branch
      %12 = sbr.rel (0) target = $region9
    $region8: #{tpu_custom_call.1} parent=1 // pred_region
      %s14 = ssub.s32 256, 256
      %15 = vsyncadd [#allocation5], %s14
      %s17 = sshll.u32 [#allocation4], 4
      %s18 = int_to_ptr.vmem [resolvable:$true] %s17
      %20 = dma.hbm_to_vmem [thread:$0]  %s1, 256, %s18, [#allocation5]
    $region9: #{tpu_custom_call.1} parent=1 // pred_fallthru
      _
    // Predicated region
    $region10: #{tpu_custom_call.1} parent=1 // pred_check
      _
    $region11: #{tpu_custom_call.1} parent=1 // pred_check_branch
      %22 = sbr.rel (0) target = $region13
    $region12: #{tpu_custom_call.1} parent=1 // pred_region
      %23 = dma.done [#allocation5], 256
    $region13: #{tpu_custom_call.1} parent=1 // pred_fallthru
      _
    %p24 = scmp.eq.s32.totalorder 0, 0
    // Predicated region
    $region14: #{tpu_custom_call.1} parent=1 // pred_check
      %p25 = pneg %p24
    $region15: #{tpu_custom_call.1} parent=1 // pred_check_branch
      %27 = sbr.rel (%p25) target = $region17
    $region16: #{tpu_custom_call.1} parent=1 // pred_region
      %vm28 = vcmask 7168
      %29 = vst.msk [vmem:[#allocation2] sm:$0xff] %vm28, 0.0
    $region17: #{tpu_custom_call.1} parent=1 // pred_fallthru
      _
    %s30 = sld [smem:[#allocation3]]
    %v31 = vld [vmem:[#allocation4] sm:$0xff]
    %v32 = vld [vmem:[#allocation4 + $0x8] sm:$0xff]
    %v33 = vmax.f32 %v31, 1e-06
    %v34 = vmax.f32 %v32, 1e-06
    %v35 = vlog2.pop %v33
    %v36 = vmul.f32 %v35, 0.6931472
    %v37 = vlog2.pop %v34
    %v38 = vmul.f32 %v37, 0.6931472
    %v39 = vstv %s30
    %v40 = vmul.f32 %v39, %v36
    %v41 = vmul.f32 %v39, %v38
    %v42 = vmul.f32 %v40, 1.442695
    %v43 = vpow.pop %v42
    %v44 = vmul.f32 %v41, 1.442695
    %v45 = vpow.pop %v44
    %v46 = vld [vmem:[#allocation2] sm:$0xff]
    %v47 = vadd.f32 %v43, %v45
    %48 = vadd.xlane.f32.xlu0 %v47
    %v49 = vpop.xlane.xlu0 %48
    %v50 = vadd.f32 %v46, %v49
    %vm51 = vcmask 7168
    %52 = vst.msk [vmem:[#allocation2] sm:$0xff] %vm51, %v50
    // Predicated region
    $region18: #{tpu_custom_call.1} parent=1 // pred_check
      %p53 = pneg %p24
    $region19: #{tpu_custom_call.1} parent=1 // pred_check_branch
      %55 = sbr.rel (%p53) target = $region21
    $region20: #{tpu_custom_call.1} parent=1 // pred_region
      %v56 = vstv %s30
      %v57 = vrcp.pop %v56
      %s58 = vtos %v57
      %v59 = vld [vmem:[#allocation2] sm:$0xff]
      %v60 = vmul.f32 %v59, 0.00390625
      %v61 = vlog2.pop %v60
      %v62 = vmul.f32 %v61, 0.6931472
      %v63 = vstv %s58
      %v64 = vmul.f32 %v62, %v63
      %v65 = vmul.f32 %v64, 1.442695
      %v66 = vpow.pop %v65
      %67 = vst.msk [vmem:[%s2] sm:$0xff] %vm51, %v66
    $region21: #{tpu_custom_call.1} parent=1 // pred_fallthru
      _
    // Predicated region
    $region22: #{tpu_custom_call.1} parent=1 // pred_check
      _
    $region23: #{tpu_custom_call.1} parent=1 // pred_check_branch
      %69 = sbr.rel (0) target = $region25
    $region24: #{tpu_custom_call.1} parent=1 // pred_region
      _
    $region25: #{tpu_custom_call.1} parent=1 // pred_fallthru
      _
    // Predicated region
    $region26: #{tpu_custom_call.1} parent=1 // pred_check
      _
    $region27: #{tpu_custom_call.1} parent=1 // pred_check_branch
      %71 = sbr.rel (0) target = $region29
    $region28: #{tpu_custom_call.1} parent=1 // pred_region
      _
    $region29: #{tpu_custom_call.1} parent=1 // pred_fallthru
      _
    %72 = vsyncpa [#allocation5], 1

</llo_original>
